<compile_context>
chip_gen: v7x
topology: tpu7x:2x2x1
jax: 0.10.0
libtpu: 0.0.40
codegen_flags: <defaults>
</compile_context>

<pallas_src>
import functools

import jax
import jax.numpy as jnp
from jax.experimental import pallas as pl
from jax.experimental.pallas import tpu as pltpu


# Live f32 tiles simultaneously resident in VMEM (double-buffered in/out plus
# temporaries) used for budget accounting.
_RESIDENT_LIVE_TILES = 6
_STREAM_LIVE_TILES = 5


def _vmem_limit_bytes():
    """Scoped-VMEM allowance derived from the chip (v5e/v6e 128 MiB, v7x 64 MiB)."""
    cap = 64 * 1024 * 1024                      # conservative default (v7x-sized)
    try:
        cap = int(getattr(pltpu.get_tpu_info(), "vmem_capacity_bytes", cap))
    except Exception:
        pass
    # ~half of physical VMEM, leaving headroom for compiler-internal scratch and
    # the pipeline's own double buffers.
    return max(8 * 1024 * 1024, min(cap // 2, 64 * 1024 * 1024))


def _lane_tile_candidates(D):
    """Full-D first (contiguous HBM rows), then 128-aligned divisors of D, descending."""
    cands = [D]
    c = (D // 128) * 128
    while c >= 128:
        if c < D and D % c == 0:
            cands.append(c)
        c -= 128
    return cands


def _validate_tile_d(tile_d, D):
    if not (tile_d == D or (tile_d % 128 == 0 and D % tile_d == 0)):
        raise ValueError("tile_d must equal D or be a lane-aligned (128) divisor of D")


def _cmvn_ref(x, eps=1e-10):
    x32 = x.astype(jnp.float32)
    mean = jnp.mean(x32, axis=0, keepdims=True)
    var = jnp.sum((x32 - mean) ** 2, axis=0, keepdims=True) / (x.shape[0] - 1)
    return ((x32 - mean) / (eps + jnp.sqrt(var))).astype(x.dtype)


# ----------------------------------------------------------------------------
# Kernel 1: VMEM-resident single-read path (grid over D tiles only, full-T blocks).
# ----------------------------------------------------------------------------
def _cmvn_resident_kernel(x_ref, o_ref, *, T, eps):
    # One HBM read of the column block; centered (unbiased) variance and exact
    # reciprocal -- both essentially free once the block is resident in VMEM.
    x = x_ref[...].astype(jnp.float32)
    mean = jnp.sum(x, axis=0, keepdims=True) * (1.0 / T)
    xc = x - mean
    var = jnp.sum(xc * xc, axis=0, keepdims=True) * (1.0 / (T - 1))
    inv = 1.0 / (eps + jnp.sqrt(var))
    o_ref[...] = (xc * inv).astype(o_ref.dtype)


def _cmvn_resident(x, eps, tile_d, vmem_limit, donate_x):
    T, D = x.shape
    n_d = pl.cdiv(D, tile_d)
    return pl.pallas_call(
        functools.partial(_cmvn_resident_kernel, T=T, eps=eps),
        out_shape=jax.ShapeDtypeStruct((T, D), x.dtype),
        grid_spec=pltpu.PrefetchScalarGridSpec(
            num_scalar_prefetch=0,
            grid=(n_d,),
            in_specs=[pl.BlockSpec((T, tile_d), lambda d: (0, d))],
            out_specs=pl.BlockSpec((T, tile_d), lambda d: (0, d)),
        ),
        compiler_params=pltpu.CompilerParams(
            dimension_semantics=("parallel",),
            vmem_limit_bytes=vmem_limit,
        ),
        input_output_aliases=({0: 0} if donate_x else {}),
    )(x)


# ----------------------------------------------------------------------------
# Kernel 2: fused streaming path (single launch, phase axis: 0=stats, 1=normalize).
# ----------------------------------------------------------------------------
def _cmvn_streaming_kernel(x_ref, o_ref, acc_s, acc_q, mean_s, inv_s,
                           *, T, tile_t, eps):
    p = pl.program_id(1)            # phase: 0 = accumulate stats, 1 = normalize
    t = pl.program_id(2)
    n_t = pl.num_programs(2)

    @pl.when((p == 0) & (t == 0))
    def _init():
        acc_s[...] = jnp.zeros_like(acc_s)
        acc_q[...] = jnp.zeros_like(acc_q)

    @pl.when(p == 0)
    def _accumulate():
        x = x_ref[...].astype(jnp.float32)

        def add(xv):
            if tile_t % 8 == 0:
                # Wide-VALU path: defer the 8->1 sublane reduce to the finalize.
                acc_s[...] += xv.reshape(-1, 8, xv.shape[-1]).sum(axis=0)
                acc_q[...] += (xv * xv).reshape(-1, 8, xv.shape[-1]).sum(axis=0)
            else:                    # only when tile_t == T (single full-extent tile)
                acc_s[0:1, :] += jnp.sum(xv, axis=0, keepdims=True)
                acc_q[0:1, :] += jnp.sum(xv * xv, axis=0, keepdims=True)

        if T % tile_t != 0:
            # Mask the padded rows on the ragged last tile only (pl.when-gated,
            # so full tiles pay no iota/compare/select cost).
            @pl.when(t == n_t - 1)
            def _ragged():
                row = jax.lax.broadcasted_iota(jnp.int32, x.shape, 0) + t * tile_t
                add(jnp.where(row < T, x, 0.0))

            @pl.when(t != n_t - 1)
            def _full():
                add(x)
        else:
            add(x)

        @pl.when(t == n_t - 1)
        def _finalize():
            s = jnp.sum(acc_s[...], axis=0, keepdims=True)
            ss = jnp.sum(acc_q[...], axis=0, keepdims=True)
            mean = s * (1.0 / T)
            # Unbiased variance (matches torch.std default); clamp tiny negative
            # residue from floating-point cancellation.
            var = jnp.maximum((ss - T * mean * mean) * (1.0 / (T - 1)), 0.0)
            mean_s[...] = mean
            inv_s[...] = 1.0 / (eps + jnp.sqrt(var))   # exact; runs once per column block

    @pl.when(p == 1)
    def _normalize():
        x = x_ref[...].astype(jnp.float32)
        o_ref[...] = ((x - mean_s[...]) * inv_s[...]).astype(o_ref.dtype)


def _cmvn_streaming(x, eps, tile_t, tile_d, vmem_limit, donate_x):
    T, D = x.shape
    n_d = pl.cdiv(D, tile_d)
    n_t = pl.cdiv(T, tile_t)
    return pl.pallas_call(
        functools.partial(_cmvn_streaming_kernel, T=T, tile_t=tile_t, eps=eps),
        out_shape=jax.ShapeDtypeStruct((T, D), x.dtype),
        grid_spec=pltpu.PrefetchScalarGridSpec(
            num_scalar_prefetch=0,
            grid=(n_d, 2, n_t),      # D tiles (parallel) x phase x T tiles (last)
            in_specs=[pl.BlockSpec((tile_t, tile_d), lambda d, p, t: (t, d))],
            # During the stats phase (p == 0) the output block index is pinned to
            # (0, d); it only advances -- and is therefore only flushed to HBM --
            # after phase 1 has written it, so each block is written exactly once.
            out_specs=pl.BlockSpec((tile_t, tile_d), lambda d, p, t: (t * p, d)),
            scratch_shapes=[
                pltpu.VMEM((8, tile_d), jnp.float32),   # partial sums
                pltpu.VMEM((8, tile_d), jnp.float32),   # partial sum of squares
                pltpu.VMEM((1, tile_d), jnp.float32),   # mean
                pltpu.VMEM((1, tile_d), jnp.float32),   # 1 / (eps + std)
            ],
        ),
        compiler_params=pltpu.CompilerParams(
            dimension_semantics=("parallel", "arbitrary", "arbitrary"),
            vmem_limit_bytes=vmem_limit,
        ),
        input_output_aliases=({0: 0} if donate_x else {}),
    )(x)


# ----------------------------------------------------------------------------
# Public entry points.
# ----------------------------------------------------------------------------
def cmvn(x, use_cmvn=True, eps=1e-10, *, mode="auto", tile_t=None, tile_d=None,
         donate_x=False, min_pallas_bytes=1 << 20, force_pallas=False):
    """Apply CMVN over axis 0 of a (T, D) array."""
    if not use_cmvn:
        return x
    if x.ndim != 2:
        raise ValueError("cmvn expects a (T, D) array; use cmvn_batched for (B, T, D)")
    T, D = x.shape
    if T < 2:
        raise ValueError("CMVN needs >= 2 frames (unbiased std divides by T-1)")

    # Tiny inputs: XLA fusion beats kernel launch + pipeline priming overhead.
    if not force_pallas and (x.size * x.dtype.itemsize) < min_pallas_bytes:
        return _cmvn_ref(x, eps)

    vmem_limit = _vmem_limit_bytes()
    cands = _lane_tile_candidates(D)

    # --- VMEM-resident single-read path (1 HBM read + 1 write of x) ----------
    if mode in ("auto", "resident") and tile_t is None:
        res_cands = [tile_d] if tile_d is not None else cands
        for c in res_cands:
            _validate_tile_d(c, D)
            if _RESIDENT_LIVE_TILES * T * c * 4 <= vmem_limit:
                return _cmvn_resident(x, eps, c, vmem_limit, donate_x)
        if mode == "resident":
            raise ValueError("input too large for the VMEM-resident CMVN path")

    # --- Fused streaming path (2 reads + 1 write, single launch) --------------
    if tile_d is None:
        fitting = [c for c in cands if _STREAM_LIVE_TILES * 8 * c * 4 <= vmem_limit]
        tile_d = fitting[0] if fitting else cands[-1]
    else:
        _validate_tile_d(tile_d, D)
    if tile_t is None:
        max_t = vmem_limit // (_STREAM_LIVE_TILES * 4 * tile_d)
        tile_t = max(8, min(T, max_t))
    tile_t = min(tile_t, T)
    if tile_t < T:
        tile_t = min(max(8, (tile_t // 8) * 8), T)    # sublane-aligned (or full T)
    return _cmvn_streaming(x, eps, tile_t, tile_d, vmem_limit, donate_x)


def cmvn_batched(x, use_cmvn=True, eps=1e-10, **kwargs):
    """CMVN over time for a batch of equal-length utterances, shape (B, T, D).

    Utterances are folded into the lane dimension ((T, B*D)) so the whole batch
    shares a single kernel launch and fills vreg lanes densely (80 mel bins
    alone only uses 80/128 of a lane group).
    """
    if x.ndim != 3:
        raise ValueError("cmvn_batched expects a (B, T, D) array")
    if not use_cmvn:
        return x
    B, T, D = x.shape
    folded = jnp.moveaxis(x, 0, 1).reshape(T, B * D)
    out = cmvn(folded, use_cmvn=True, eps=eps, **kwargs)
    return jnp.moveaxis(out.reshape(T, B, D), 0, 1)


if __name__ == "__main__":
    key = jax.random.PRNGKey(0)
    k1, k2, k3 = jax.random.split(key, 3)

    # (1) fbank-like single utterance: ~1 s of 16 kHz audio at 10 ms frame shift,
    #     80 mel bins. Full-D lane block, VMEM-resident path.
    T1, D1 = 98, 80
    x1 = jax.random.normal(k1, (T1, D1), dtype=jnp.float32) * 3.0 + 1.5
    out1 = jax.block_until_ready(cmvn(x1, force_pallas=True))
    ref1 = _cmvn_ref(x1)
    assert out1.shape == x1.shape and out1.dtype == x1.dtype
    assert jnp.allclose(out1, ref1, atol=1e-4, rtol=1e-4), "mismatch (resident)"

    # (2) Fused streaming path (forced via tile_t) with a ragged last T tile.
    T2, D2 = 600, 128
    x2 = jax.random.normal(k2, (T2, D2), dtype=jnp.float32) * 2.0 - 0.7
    out2 = jax.block_until_ready(cmvn(x2, tile_t=64, force_pallas=True))
    ref2 = _cmvn_ref(x2)
    assert jnp.allclose(out2, ref2, atol=1e-3, rtol=1e-3), "mismatch (streaming)"

    # (3) Donated-input path (input_output_aliases on x), resident variant.
    out3 = jax.block_until_ready(cmvn(x2 + 0.0, force_pallas=True, donate_x=True))
    assert jnp.allclose(out3, ref2, atol=1e-4, rtol=1e-4), "mismatch (donated)"

    # (4) Batched entry point: 3 utterances folded into the lane dimension.
    B4, T4, D4 = 3, 120, 80
    x4 = jax.random.normal(k3, (B4, T4, D4), dtype=jnp.float32) * 1.7 + 0.3
    out4 = jax.block_until_ready(cmvn_batched(x4, force_pallas=True))
    ref4 = jnp.stack([_cmvn_ref(x4[b]) for b in range(B4)])
    assert jnp.allclose(out4, ref4, atol=1e-4, rtol=1e-4), "mismatch (batched)"

    # (5) Tiny-input jnp fallback and use_cmvn=False identity.
    out5 = jax.block_until_ready(cmvn(x1))           # below min_pallas_bytes
    assert jnp.allclose(out5, ref1, atol=1e-5, rtol=1e-5), "mismatch (fallback)"
    assert jnp.array_equal(cmvn(x1, use_cmvn=False), x1)

    print("KERNEL_OK")
</pallas_src>

<mosaic_0001>
module attributes {stable_mosaic.version = 11 : i64} {
  func.func @_cmvn_resident_kernel(%arg0: i32, %arg1: memref<98x80xf32, #tpu.memory_space<vmem>>, %arg2: memref<98x80xf32, #tpu.memory_space<vmem>>) attributes {dimension_semantics = [#tpu.dimension_semantics<parallel>], iteration_bounds = array<i64: 1>, scalar_prefetch = 0 : i64, scratch_operands = 0 : i64, tpu.core_type = #tpu.core_type<tc>, window_params = [{transform_indices = @transform_0, window_bounds = array<i64: 98, 80>}, {transform_indices = @transform_1, window_bounds = array<i64: 98, 80>}]} {
    %c0 = arith.constant 0 : index
    %c0_0 = arith.constant 0 : index
    %0 = vector.load %arg1[%c0, %c0_0] : memref<98x80xf32, #tpu.memory_space<vmem>>, vector<98x80xf32>
    %cst = arith.constant dense<0.000000e+00> : vector<80xf32>
    %1 = vector.multi_reduction <add>, %0, %cst [0] : vector<98x80xf32> to vector<80xf32>
    %2 = vector.shape_cast %1 : vector<80xf32> to vector<1x80xf32>
    %cst_1 = arith.constant 0.0102040814 : f32
    %3 = vector.broadcast %cst_1 : f32 to vector<1x80xf32>
    %4 = arith.mulf %2, %3 : vector<1x80xf32>
    %5 = vector.broadcast %4 : vector<1x80xf32> to vector<98x80xf32>
    %6 = arith.subf %0, %5 : vector<98x80xf32>
    %7 = arith.mulf %6, %6 : vector<98x80xf32>
    %cst_2 = arith.constant dense<0.000000e+00> : vector<80xf32>
    %8 = vector.multi_reduction <add>, %7, %cst_2 [0] : vector<98x80xf32> to vector<80xf32>
    %9 = vector.shape_cast %8 : vector<80xf32> to vector<1x80xf32>
    %cst_3 = arith.constant 0.010309278 : f32
    %10 = vector.broadcast %cst_3 : f32 to vector<1x80xf32>
    %11 = arith.mulf %9, %10 : vector<1x80xf32>
    %12 = math.sqrt %11 : vector<1x80xf32>
    %cst_4 = arith.constant 1.000000e-10 : f32
    %13 = vector.broadcast %cst_4 : f32 to vector<1x80xf32>
    %14 = arith.addf %13, %12 : vector<1x80xf32>
    %cst_5 = arith.constant 1.000000e+00 : f32
    %15 = vector.broadcast %cst_5 : f32 to vector<1x80xf32>
    %16 = arith.divf %15, %14 : vector<1x80xf32>
    %17 = vector.broadcast %16 : vector<1x80xf32> to vector<98x80xf32>
    %18 = arith.mulf %6, %17 : vector<98x80xf32>
    %c0_6 = arith.constant 0 : index
    %c0_7 = arith.constant 0 : index
    %19 = vector.load %arg2[%c0_6, %c0_7] : memref<98x80xf32, #tpu.memory_space<vmem>>, vector<98x80xf32>
    tpu.vector_store %arg2[%c0_6, %c0_7], %18 {strides = array<i32>} : memref<98x80xf32, #tpu.memory_space<vmem>>, vector<98x80xf32>,
    return
  }
  func.func @transform_0(%arg0: i32) -> (i32, i32) {
    %c0_i32 = arith.constant 0 : i32
    %c0_i32_0 = arith.constant 0 : i32
    return %c0_i32, %arg0 : i32, i32
  }
  func.func @transform_1(%arg0: i32) -> (i32, i32) {
    %c0_i32 = arith.constant 0 : i32
    %c0_i32_0 = arith.constant 0 : i32
    return %c0_i32, %arg0 : i32, i32
  }
}

</mosaic_0001>

<llo_original>
// kernel: tpu_custom_call.1
$region0: #{tpu_custom_call.1}
  #allocation0 [shape = 'u32[]', space=smem, size = 0x4, offset = 0x4, fixed_abs, tag = 'smem constant byte address 0x4 - core index']
  #allocation1 [shape = 'u32[144,128]{1,0:T(1,128)}', space=vmem, size = 0x12000, scoped, tag = 'internal scratch']
  %s0 = inlined_call_operand.vmem [shape: f32[98,80], index: 0, kind: input, shape index: {}]
  %s1 = inlined_call_operand.vmem [shape: f32[98,80], index: 1, kind: output, shape index: {}]
  %s2 = sld [smem:[#allocation0]]
  $region14: #{tpu_custom_call.1} parent=0
    _
  %s4 = ssub.s32 1, %s2
  %s5 = scalar_select 0, %s4, %s2
  // Predicated region
  $region2: #{tpu_custom_call.1} parent=0 // pred_check
    _
  $region3: #{tpu_custom_call.1} parent=0 // pred_check_branch
    %7 = sbr.rel (0) target = $region5
  $region4: #{tpu_custom_call.1} parent=0 // pred_region
    _
  $region5: #{tpu_custom_call.1} parent=0 // pred_fallthru
    _
  %v8 = vld [vmem:[%s0] sm:$0xff]
  %v9 = vld [vmem:[%s0 + $0x8] sm:$0xff]
  %v10 = vld [vmem:[%s0 + $0x10] sm:$0xff]
  %v11 = vld [vmem:[%s0 + $0x18] sm:$0xff]
  %v12 = vld [vmem:[%s0 + $0x20] sm:$0xff]
  %v13 = vld [vmem:[%s0 + $0x28] sm:$0xff]
  %v14 = vld [vmem:[%s0 + $0x30] sm:$0xff]
  %v15 = vld [vmem:[%s0 + $0x38] sm:$0xff]
  %v16 = vld [vmem:[%s0 + $0x40] sm:$0xff]
  %v17 = vld [vmem:[%s0 + $0x48] sm:$0xff]
  %v18 = vld [vmem:[%s0 + $0x50] sm:$0xff]
  %v19 = vld [vmem:[%s0 + $0x58] sm:$0xff]
  %v20 = vld [vmem:[%s0 + $0x60] sm:$0x3]
  %vm21 = vcmask 654336
  %v22 = vsel %vm21, %v8, 0.0
  %v23 = vsel %vm21, %v9, 0.0
  %v24 = vadd.f32 %v22, %v23
  %v25 = vsel %vm21, %v10, 0.0
  %v26 = vadd.f32 %v24, %v25
  %v27 = vsel %vm21, %v11, 0.0
  %v28 = vadd.f32 %v26, %v27
  %v29 = vsel %vm21, %v12, 0.0
  %v30 = vadd.f32 %v28, %v29
  %v31 = vsel %vm21, %v13, 0.0
  %v32 = vadd.f32 %v30, %v31
  %v33 = vsel %vm21, %v14, 0.0
  %v34 = vadd.f32 %v32, %v33
  %v35 = vsel %vm21, %v15, 0.0
  %v36 = vadd.f32 %v34, %v35
  %v37 = vsel %vm21, %v16, 0.0
  %v38 = vadd.f32 %v36, %v37
  %v39 = vsel %vm21, %v17, 0.0
  %v40 = vadd.f32 %v38, %v39
  %v41 = vsel %vm21, %v18, 0.0
  %v42 = vadd.f32 %v40, %v41
  %v43 = vsel %vm21, %v19, 0.0
  %v44 = vadd.f32 %v42, %v43
  %vm45 = vcmask 648192
  %v46 = vsel %vm45, %v20, 0.0
  %v47 = vadd.f32 %v44, %v46
  %v48 = vrot.slane %v47, 4
  %v49 = vadd.f32 %v47, %v48
  %v50 = vrot.slane %v49, 2
  %v51 = vadd.f32 %v49, %v50
  %v52 = vrot.slane %v51, 1
  %v53 = vadd.f32 %v51, %v52
  %v54 = vmul.f32 %v53, 0.010204081
  %v55 = vsub.f32 %v8, %v54
  %v56 = vsub.f32 %v9, %v54
  %v57 = vsub.f32 %v10, %v54
  %v58 = vsub.f32 %v11, %v54
  %v59 = vsub.f32 %v12, %v54
  %v60 = vsub.f32 %v13, %v54
  %v61 = vsub.f32 %v14, %v54
  %v62 = vsub.f32 %v15, %v54
  %v63 = vsub.f32 %v16, %v54
  %v64 = vsub.f32 %v17, %v54
  %v65 = vsub.f32 %v18, %v54
  %v66 = vsub.f32 %v19, %v54
  %v67 = vsub.f32 %v20, %v54
  %v68 = vmul.f32 %v55, %v55
  %v69 = vmul.f32 %v56, %v56
  %v70 = vmul.f32 %v57, %v57
  %v71 = vmul.f32 %v58, %v58
  %v72 = vmul.f32 %v59, %v59
  %v73 = vmul.f32 %v60, %v60
  %v74 = vmul.f32 %v61, %v61
  %v75 = vmul.f32 %v62, %v62
  %v76 = vmul.f32 %v63, %v63
  %v77 = vmul.f32 %v64, %v64
  %v78 = vmul.f32 %v65, %v65
  %v79 = vmul.f32 %v66, %v66
  %v80 = vmul.f32 %v67, %v67
  %v81 = vsel %vm21, %v68, 0.0
  %v82 = vsel %vm21, %v69, 0.0
  %v83 = vadd.f32 %v81, %v82
  %v84 = vsel %vm21, %v70, 0.0
  %v85 = vadd.f32 %v83, %v84
  %v86 = vsel %vm21, %v71, 0.0
  %v87 = vadd.f32 %v85, %v86
  %v88 = vsel %vm21, %v72, 0.0
  %v89 = vadd.f32 %v87, %v88
  %v90 = vsel %vm21, %v73, 0.0
  %v91 = vadd.f32 %v89, %v90
  %v92 = vsel %vm21, %v74, 0.0
  %v93 = vadd.f32 %v91, %v92
  %v94 = vsel %vm21, %v75, 0.0
  %v95 = vadd.f32 %v93, %v94
  %v96 = vsel %vm21, %v76, 0.0
  %v97 = vadd.f32 %v95, %v96
  %v98 = vsel %vm21, %v77, 0.0
  %v99 = vadd.f32 %v97, %v98
  %v100 = vsel %vm21, %v78, 0.0
  %v101 = vadd.f32 %v99, %v100
  %v102 = vsel %vm21, %v79, 0.0
  %v103 = vadd.f32 %v101, %v102
  %v104 = vsel %vm45, %v80, 0.0
  %v105 = vadd.f32 %v103, %v104
  %v106 = vrot.slane %v105, 4
  %v107 = vadd.f32 %v105, %v106
  %v108 = vrot.slane %v107, 2
  %v109 = vadd.f32 %v107, %v108
  %v110 = vrot.slane %v109, 1
  %v111 = vadd.f32 %v109, %v110
  %v112 = vmul.f32 %v111, 0.010309278
  %v113 = vrsqrt.pop %v112
  %v114 = vmul.f32 %v112, %v113
  %vm115 = vcmp.eq.f32.partialorder %v112, inf
  %v116 = vsel %vm115, %v112, %v114
  %vm117 = vcmp.eq.f32.partialorder %v112, 0.0
  %v118 = vand.u32 %v112, 2147483648
  %v119 = vsel %vm117, %v118, %v116
  %v120 = vadd.f32 %v119, 1e-10
  %v121 = vrcp.pop %v120
  %v122 = vmul.f32 1.0, %v121
  %v123 = vmul.f32 %v55, %v122
  %v124 = vmul.f32 %v56, %v122
  %v125 = vmul.f32 %v57, %v122
  %v126 = vmul.f32 %v58, %v122
  %v127 = vmul.f32 %v59, %v122
  %v128 = vmul.f32 %v60, %v122
  %v129 = vmul.f32 %v61, %v122
  %v130 = vmul.f32 %v62, %v122
  %v131 = vmul.f32 %v63, %v122
  %v132 = vmul.f32 %v64, %v122
  %v133 = vmul.f32 %v65, %v122
  %v134 = vmul.f32 %v66, %v122
  %v135 = vmul.f32 %v67, %v122
  %136 = vst.msk [vmem:[%s1] sm:$0xff] %vm21, %v123
  %137 = vst.msk [vmem:[%s1 + $0x8] sm:$0xff] %vm21, %v124
  %138 = vst.msk [vmem:[%s1 + $0x10] sm:$0xff] %vm21, %v125
  %139 = vst.msk [vmem:[%s1 + $0x18] sm:$0xff] %vm21, %v126
  %140 = vst.msk [vmem:[%s1 + $0x20] sm:$0xff] %vm21, %v127
  %141 = vst.msk [vmem:[%s1 + $0x28] sm:$0xff] %vm21, %v128
  %142 = vst.msk [vmem:[%s1 + $0x30] sm:$0xff] %vm21, %v129
  %143 = vst.msk [vmem:[%s1 + $0x38] sm:$0xff] %vm21, %v130
  %144 = vst.msk [vmem:[%s1 + $0x40] sm:$0xff] %vm21, %v131
  %145 = vst.msk [vmem:[%s1 + $0x48] sm:$0xff] %vm21, %v132
  %146 = vst.msk [vmem:[%s1 + $0x50] sm:$0xff] %vm21, %v133
  %147 = vst.msk [vmem:[%s1 + $0x58] sm:$0xff] %vm21, %v134
  %148 = vst.msk [vmem:[%s1 + $0x60] sm:$0x3] %vm45, %v135
  // Predicated region
  $region6: #{tpu_custom_call.1} parent=0 // pred_check
    _
  $region7: #{tpu_custom_call.1} parent=0 // pred_check_branch
    %150 = sbr.rel (0) target = $region9
  $region8: #{tpu_custom_call.1} parent=0 // pred_region
    _
  $region9: #{tpu_custom_call.1} parent=0 // pred_fallthru
    _
  // Predicated region
  $region10: #{tpu_custom_call.1} parent=0 // pred_check
    _
  $region11: #{tpu_custom_call.1} parent=0 // pred_check_branch
    %152 = sbr.rel (0) target = $region13
  $region12: #{tpu_custom_call.1} parent=0 // pred_region
    _
  $region13: #{tpu_custom_call.1} parent=0 // pred_fallthru
    _

</llo_original>
